<compile_context>
chip_gen: v7x
topology: tpu7x:2x2x1
jax: 0.10.0
libtpu: 0.0.40
codegen_flags: <defaults>
</compile_context>

<pallas_src>
import jax
import jax.numpy as jnp
from jax.experimental import pallas as pl
from jax.experimental.pallas import tpu as pltpu

EPS = 1e-5
HID = 128          # padded hidden lane width
MATMUL_DTYPE = jnp.bfloat16


def _mlp_kernel(x_ref, w1_ref, b1_ref, w2_ref, b2_ref, w3_ref, b3_ref,
                w4_ref, b4_ref, o_ref):
    # in-kernel f32 -> bf16 cast of the input tile (VPU filler under the MXU)
    x = x_ref[...].astype(w1_ref.dtype)

    # layer1 (BN1 folded) + ReLU
    h = jnp.dot(x, w1_ref[...],
                preferred_element_type=jnp.float32) + b1_ref[...]
    h = jnp.maximum(h, 0.0)
    # dropout (p=0.2) -> identity in eval mode

    # layer2 (BN2 folded) + ReLU
    h = jnp.dot(h.astype(w2_ref.dtype), w2_ref[...],
                preferred_element_type=jnp.float32) + b2_ref[...]
    h = jnp.maximum(h, 0.0)
    # dropout (p=0.2) -> identity in eval mode

    # layer3 (BN3 folded) + ReLU
    h = jnp.dot(h.astype(w3_ref.dtype), w3_ref[...],
                preferred_element_type=jnp.float32) + b3_ref[...]
    h = jnp.maximum(h, 0.0)

    # layer4 (no BN / activation); w4 is (128, 1) (K padded, N = 1 real col)
    y = jnp.dot(h.astype(w4_ref.dtype), w4_ref[...],
                preferred_element_type=jnp.float32) + b4_ref[...]
    o_ref[...] = y.astype(o_ref.dtype)


def _round_up(x, m):
    return ((x + m - 1) // m) * m


def _pad2(a, rows, cols):
    r, c = a.shape
    return jnp.pad(a, ((0, rows - r), (0, cols - c)))


def prepare_kernel_params(params, matmul_dtype=MATMUL_DTYPE):
    """Fold BN into preceding Linear, zero-pad hidden widths, cast weights.

    Call this ONCE per set of model parameters (it is constant w.r.t. x) and
    reuse the returned tuple for every forward call.
    """
    def fold(w, b, g, beta, m, v):
        scale = g * jax.lax.rsqrt(v + EPS)        # (1, C)
        return w * scale, (b - m) * scale + beta

    w1, b1 = fold(params["w1"], params["b1"], params["g1"], params["beta1"],
                  params["m1"], params["v1"])
    w2, b2 = fold(params["w2"], params["b2"], params["g2"], params["beta2"],
                  params["m2"], params["v2"])
    w3, b3 = fold(params["w3"], params["b3"], params["g3"], params["beta3"],
                  params["m3"], params["v3"])
    w4, b4 = params["w4"], params["b4"]

    w1p, b1p = w1, b1                                   # (F, 128),  (1, 128)
    w2p, b2p = _pad2(w2, HID, HID), _pad2(b2, 1, HID)   # (128,128), (1, 128)
    w3p, b3p = _pad2(w3, HID, HID), _pad2(b3, 1, HID)   # (128,128), (1, 128)
    w4p, b4p = _pad2(w4, HID, 1), b4                    # (128, 1),  (1, 1)

    cast = lambda w: w.astype(matmul_dtype)
    # biases stay f32 (elementwise math in f32; important on v5e)
    return (cast(w1p), b1p.astype(jnp.float32),
            cast(w2p), b2p.astype(jnp.float32),
            cast(w3p), b3p.astype(jnp.float32),
            cast(w4p), b4p.astype(jnp.float32))


def price_predictor_forward(x, kparams, *, block_m=None):
    """x: (B, input_size) float32. kparams: output of prepare_kernel_params.

    Returns (B, 1) float32.
    """
    B, F = x.shape

    if block_m is None:
        if B <= 128:
            # tiny-batch latency path: pad only to a bf16 sublane pack of 16
            block_m = max(16, _round_up(B, 16))
        elif B <= 4096:
            # >= 2 grid blocks so "parallel" shards across both v7x TensorCores
            block_m = _round_up(pl.cdiv(B, 2), 128)
        else:
            # large-batch path: fewer grid steps (per-step overhead ~0.35 us)
            block_m = 2048

    B_pad = _round_up(B, block_m)
    n_blocks = B_pad // block_m

    # x stays f32 here; the bf16 cast happens inside the kernel.
    x_p = x if B_pad == B else jnp.pad(x, ((0, B_pad - B), (0, 0)))

    def resident_spec(a):
        return pl.BlockSpec(a.shape, lambda i: (0, 0))

    in_specs = [pl.BlockSpec((block_m, F), lambda i: (i, 0))]
    in_specs += [resident_spec(a) for a in kparams]
    # narrow output: last dim 1 equals the full array dim -> legal block
    out_spec = pl.BlockSpec((block_m, 1), lambda i: (i, 0))

    out = pl.pallas_call(
        _mlp_kernel,
        out_shape=jax.ShapeDtypeStruct((B_pad, 1), jnp.float32),
        grid=(n_blocks,),
        in_specs=in_specs,
        out_specs=out_spec,
        compiler_params=pltpu.CompilerParams(
            dimension_semantics=("parallel",)),
    )(x_p, *kparams)

    return out[:B, :]


def init_params(key, input_size):
    """Deterministic synthetic parameters matching PricePredictor.__init__ shapes."""
    dims = [(input_size, 128), (128, 64), (64, 32), (32, 1)]
    keys = jax.random.split(key, 16)
    p = {}
    ki = 0
    for li, (din, dout) in enumerate(dims, start=1):
        bound = 1.0 / (din ** 0.5)
        p[f"w{li}"] = jax.random.uniform(keys[ki], (din, dout), jnp.float32, -bound, bound); ki += 1
        p[f"b{li}"] = jax.random.uniform(keys[ki], (1, dout), jnp.float32, -bound, bound); ki += 1
    # BatchNorm1d params / running stats (as 2-D (1, C) rows for lane broadcasting)
    for li, c in zip((1, 2, 3), (128, 64, 32)):
        p[f"g{li}"] = 1.0 + 0.1 * jax.random.normal(keys[ki], (1, c), jnp.float32); ki += 1
        p[f"beta{li}"] = 0.1 * jax.random.normal(keys[ki], (1, c), jnp.float32); ki += 1
        p[f"m{li}"] = 0.05 * jnp.arange(c, dtype=jnp.float32).reshape(1, c) / c
        p[f"v{li}"] = jnp.ones((1, c), jnp.float32) + 0.01 * jnp.arange(c, dtype=jnp.float32).reshape(1, c)
    return p


def _reference(x, p):
    h = x @ p["w1"] + p["b1"]
    h = (h - p["m1"]) / jnp.sqrt(p["v1"] + EPS) * p["g1"] + p["beta1"]
    h = jnp.maximum(h, 0.0)
    h = h @ p["w2"] + p["b2"]
    h = (h - p["m2"]) / jnp.sqrt(p["v2"] + EPS) * p["g2"] + p["beta2"]
    h = jnp.maximum(h, 0.0)
    h = h @ p["w3"] + p["b3"]
    h = (h - p["m3"]) / jnp.sqrt(p["v3"] + EPS) * p["g3"] + p["beta3"]
    h = jnp.maximum(h, 0.0)
    return h @ p["w4"] + p["b4"]


if __name__ == "__main__":
    key = jax.random.PRNGKey(0)
    kx, kp = jax.random.split(key)

    batch = 8
    input_size = 32
    x = jax.random.normal(kx, (batch, input_size), jnp.float32)
    params = init_params(kp, input_size)

    # BN fold / pad / cast hoisted out of the per-call path (constant w.r.t. x)
    kparams = prepare_kernel_params(params)

    out = price_predictor_forward(x, kparams)
    out = jax.block_until_ready(out)

    ref = _reference(x, params)
    assert out.shape == (batch, 1)
    # bf16 matmuls -> relaxed tolerance vs. full-f32 reference
    assert jnp.allclose(out, ref, atol=5e-2, rtol=5e-2), "Pallas kernel mismatch vs reference"

    print("KERNEL_OK")
</pallas_src>

<mosaic_0001>
module attributes {stable_mosaic.version = 11 : i64} {
  func.func @_mlp_kernel(%arg0: i32, %arg1: memref<16x32xf32, #tpu.memory_space<vmem>>, %arg2: memref<32x128xbf16, #tpu.memory_space<vmem>>, %arg3: memref<1x128xf32, #tpu.memory_space<vmem>>, %arg4: memref<128x128xbf16, #tpu.memory_space<vmem>>, %arg5: memref<1x128xf32, #tpu.memory_space<vmem>>, %arg6: memref<128x128xbf16, #tpu.memory_space<vmem>>, %arg7: memref<1x128xf32, #tpu.memory_space<vmem>>, %arg8: memref<128x1xbf16, #tpu.memory_space<vmem>>, %arg9: memref<1x1xf32, #tpu.memory_space<vmem>>, %arg10: memref<16x1xf32, #tpu.memory_space<vmem>>) attributes {dimension_semantics = [#tpu.dimension_semantics<parallel>], iteration_bounds = array<i64: 1>, scalar_prefetch = 0 : i64, scratch_operands = 0 : i64, tpu.core_type = #tpu.core_type<tc>, window_params = [{transform_indices = @transform_0, window_bounds = array<i64: 16, 32>}, {pipeline_mode = #tpu.pipeline_mode<synchronous>, transform_indices = @transform_1, window_bounds = array<i64: 32, 128>}, {pipeline_mode = #tpu.pipeline_mode<synchronous>, transform_indices = @transform_2, window_bounds = array<i64: 1, 128>}, {pipeline_mode = #tpu.pipeline_mode<synchronous>, transform_indices = @transform_3, window_bounds = array<i64: 128, 128>}, {pipeline_mode = #tpu.pipeline_mode<synchronous>, transform_indices = @transform_4, window_bounds = array<i64: 1, 128>}, {pipeline_mode = #tpu.pipeline_mode<synchronous>, transform_indices = @transform_5, window_bounds = array<i64: 128, 128>}, {pipeline_mode = #tpu.pipeline_mode<synchronous>, transform_indices = @transform_6, window_bounds = array<i64: 1, 128>}, {pipeline_mode = #tpu.pipeline_mode<synchronous>, transform_indices = @transform_7, window_bounds = array<i64: 128, 1>}, {pipeline_mode = #tpu.pipeline_mode<synchronous>, transform_indices = @transform_8, window_bounds = array<i64: 1, 1>}, {transform_indices = @transform_9, window_bounds = array<i64: 16, 1>}]} {
    %c0 = arith.constant 0 : index
    %c0_0 = arith.constant 0 : index
    %0 = vector.load %arg1[%c0, %c0_0] : memref<16x32xf32, #tpu.memory_space<vmem>>, vector<16x32xf32>
    %1 = arith.truncf %0 : vector<16x32xf32> to vector<16x32xbf16>
    %c0_1 = arith.constant 0 : index
    %c0_2 = arith.constant 0 : index
    %2 = vector.load %arg2[%c0_1, %c0_2] : memref<32x128xbf16, #tpu.memory_space<vmem>>, vector<32x128xbf16>
    %cst = arith.constant dense<0.000000e+00> : vector<16x128xf32>
    %3 = tpu.matmul %1, %2, %cst {dimension_numbers = #tpu.dot_dimension_numbers<[1], [0], [0], [1], [0, 0, 1, 1], [], []>} : vector<16x32xbf16>, vector<32x128xbf16>, vector<16x128xf32> -> vector<16x128xf32>
    %c0_3 = arith.constant 0 : index
    %c0_4 = arith.constant 0 : index
    %4 = vector.load %arg3[%c0_3, %c0_4] : memref<1x128xf32, #tpu.memory_space<vmem>>, vector<1x128xf32>
    %5 = vector.broadcast %4 : vector<1x128xf32> to vector<16x128xf32>
    %6 = arith.addf %3, %5 : vector<16x128xf32>
    %cst_5 = arith.constant 0.000000e+00 : f32
    %7 = vector.broadcast %cst_5 : f32 to vector<16x128xf32>
    %8 = arith.maximumf %6, %7 : vector<16x128xf32>
    %9 = arith.truncf %8 : vector<16x128xf32> to vector<16x128xbf16>
    %c0_6 = arith.constant 0 : index
    %c0_7 = arith.constant 0 : index
    %10 = vector.load %arg4[%c0_6, %c0_7] : memref<128x128xbf16, #tpu.memory_space<vmem>>, vector<128x128xbf16>
    %cst_8 = arith.constant dense<0.000000e+00> : vector<16x128xf32>
    %11 = tpu.matmul %9, %10, %cst_8 {dimension_numbers = #tpu.dot_dimension_numbers<[1], [0], [0], [1], [0, 0, 1, 1], [], []>} : vector<16x128xbf16>, vector<128x128xbf16>, vector<16x128xf32> -> vector<16x128xf32>
    %c0_9 = arith.constant 0 : index
    %c0_10 = arith.constant 0 : index
    %12 = vector.load %arg5[%c0_9, %c0_10] : memref<1x128xf32, #tpu.memory_space<vmem>>, vector<1x128xf32>
    %13 = vector.broadcast %12 : vector<1x128xf32> to vector<16x128xf32>
    %14 = arith.addf %11, %13 : vector<16x128xf32>
    %cst_11 = arith.constant 0.000000e+00 : f32
    %15 = vector.broadcast %cst_11 : f32 to vector<16x128xf32>
    %16 = arith.maximumf %14, %15 : vector<16x128xf32>
    %17 = arith.truncf %16 : vector<16x128xf32> to vector<16x128xbf16>
    %c0_12 = arith.constant 0 : index
    %c0_13 = arith.constant 0 : index
    %18 = vector.load %arg6[%c0_12, %c0_13] : memref<128x128xbf16, #tpu.memory_space<vmem>>, vector<128x128xbf16>
    %cst_14 = arith.constant dense<0.000000e+00> : vector<16x128xf32>
    %19 = tpu.matmul %17, %18, %cst_14 {dimension_numbers = #tpu.dot_dimension_numbers<[1], [0], [0], [1], [0, 0, 1, 1], [], []>} : vector<16x128xbf16>, vector<128x128xbf16>, vector<16x128xf32> -> vector<16x128xf32>
    %c0_15 = arith.constant 0 : index
    %c0_16 = arith.constant 0 : index
    %20 = vector.load %arg7[%c0_15, %c0_16] : memref<1x128xf32, #tpu.memory_space<vmem>>, vector<1x128xf32>
    %21 = vector.broadcast %20 : vector<1x128xf32> to vector<16x128xf32>
    %22 = arith.addf %19, %21 : vector<16x128xf32>
    %cst_17 = arith.constant 0.000000e+00 : f32
    %23 = vector.broadcast %cst_17 : f32 to vector<16x128xf32>
    %24 = arith.maximumf %22, %23 : vector<16x128xf32>
    %25 = arith.truncf %24 : vector<16x128xf32> to vector<16x128xbf16>
    %c0_18 = arith.constant 0 : index
    %c0_19 = arith.constant 0 : index
    %26 = vector.load %arg8[%c0_18, %c0_19] : memref<128x1xbf16, #tpu.memory_space<vmem>>, vector<128x1xbf16>
    %cst_20 = arith.constant dense<0.000000e+00> : vector<16x1xf32>
    %27 = tpu.matmul %25, %26, %cst_20 {dimension_numbers = #tpu.dot_dimension_numbers<[1], [0], [0], [1], [0, 0, 1, 1], [], []>} : vector<16x128xbf16>, vector<128x1xbf16>, vector<16x1xf32> -> vector<16x1xf32>
    %c0_21 = arith.constant 0 : index
    %c0_22 = arith.constant 0 : index
    %28 = vector.load %arg9[%c0_21, %c0_22] : memref<1x1xf32, #tpu.memory_space<vmem>>, vector<1x1xf32>
    %29 = vector.broadcast %28 : vector<1x1xf32> to vector<16x1xf32>
    %30 = arith.addf %27, %29 : vector<16x1xf32>
    %c0_23 = arith.constant 0 : index
    %c0_24 = arith.constant 0 : index
    %31 = vector.load %arg10[%c0_23, %c0_24] : memref<16x1xf32, #tpu.memory_space<vmem>>, vector<16x1xf32>
    tpu.vector_store %arg10[%c0_23, %c0_24], %30 {strides = array<i32>} : memref<16x1xf32, #tpu.memory_space<vmem>>, vector<16x1xf32>,
    return
  }
  func.func @transform_0(%arg0: i32) -> (i32, i32) {
    %c0_i32 = arith.constant 0 : i32
    %c0_i32_0 = arith.constant 0 : i32
    return %arg0, %c0_i32 : i32, i32
  }
  func.func @transform_1(%arg0: i32) -> (i32, i32) {
    %c0_i32 = arith.constant 0 : i32
    %c0_i32_0 = arith.constant 0 : i32
    %c0_i32_1 = arith.constant 0 : i32
    return %c0_i32, %c0_i32_0 : i32, i32
  }
  func.func @transform_2(%arg0: i32) -> (i32, i32) {
    %c0_i32 = arith.constant 0 : i32
    %c0_i32_0 = arith.constant 0 : i32
    %c0_i32_1 = arith.constant 0 : i32
    return %c0_i32, %c0_i32_0 : i32, i32
  }
  func.func @transform_3(%arg0: i32) -> (i32, i32) {
    %c0_i32 = arith.constant 0 : i32
    %c0_i32_0 = arith.constant 0 : i32
    %c0_i32_1 = arith.constant 0 : i32
    return %c0_i32, %c0_i32_0 : i32, i32
  }
  func.func @transform_4(%arg0: i32) -> (i32, i32) {
    %c0_i32 = arith.constant 0 : i32
    %c0_i32_0 = arith.constant 0 : i32
    %c0_i32_1 = arith.constant 0 : i32
    return %c0_i32, %c0_i32_0 : i32, i32
  }
  func.func @transform_5(%arg0: i32) -> (i32, i32) {
    %c0_i32 = arith.constant 0 : i32
    %c0_i32_0 = arith.constant 0 : i32
    %c0_i32_1 = arith.constant 0 : i32
    return %c0_i32, %c0_i32_0 : i32, i32
  }
  func.func @transform_6(%arg0: i32) -> (i32, i32) {
    %c0_i32 = arith.constant 0 : i32
    %c0_i32_0 = arith.constant 0 : i32
    %c0_i32_1 = arith.constant 0 : i32
    return %c0_i32, %c0_i32_0 : i32, i32
  }
  func.func @transform_7(%arg0: i32) -> (i32, i32) {
    %c0_i32 = arith.constant 0 : i32
    %c0_i32_0 = arith.constant 0 : i32
    %c0_i32_1 = arith.constant 0 : i32
    return %c0_i32, %c0_i32_0 : i32, i32
  }
  func.func @transform_8(%arg0: i32) -> (i32, i32) {
    %c0_i32 = arith.constant 0 : i32
    %c0_i32_0 = arith.constant 0 : i32
    %c0_i32_1 = arith.constant 0 : i32
    return %c0_i32, %c0_i32_0 : i32, i32
  }
  func.func @transform_9(%arg0: i32) -> (i32, i32) {
    %c0_i32 = arith.constant 0 : i32
    %c0_i32_0 = arith.constant 0 : i32
    return %arg0, %c0_i32 : i32, i32
  }
}

</mosaic_0001>

<llo_original>
// kernel: tpu_custom_call.1
$region0: #{tpu_custom_call.1}
  #allocation0 [shape = 'u32[]', space=smem, size = 0x4, offset = 0x4, fixed_abs, tag = 'smem constant byte address 0x4 - core index']
  #allocation1 [shape = 'u32[144,128]{1,0:T(1,128)}', space=vmem, size = 0x12000, scoped, tag = 'internal scratch']
  #allocation2 [shape = 'f32[1,1]{1,0:T(1,128)S(1)}', space=vmem, size = 0x200, scoped, tag = 'scoped memory for tpu_custom_call.1']
  %s0 = inlined_call_operand.vmem [shape: f32[16,32], index: 0, kind: input, shape index: {}]
  %s1 = inlined_call_operand.hbm [shape: bf16[32,128], index: 1, kind: input, shape index: {}]
  %s2 = inlined_call_operand.hbm [shape: f32[1,128], index: 2, kind: input, shape index: {}]
  %s3 = inlined_call_operand.vmem [shape: bf16[128,128], index: 3, kind: input, shape index: {}]
  %s4 = inlined_call_operand.vmem [shape: f32[1,128], index: 4, kind: input, shape index: {}]
  %s5 = inlined_call_operand.hbm [shape: bf16[128,128], index: 5, kind: input, shape index: {}]
  %s6 = inlined_call_operand.vmem [shape: f32[1,128], index: 6, kind: input, shape index: {}]
  %s7 = inlined_call_operand.vmem [shape: bf16[128,1], index: 7, kind: input, shape index: {}]
  %s8 = inlined_call_operand.<no memory space> [shape: f32[1,1], index: 8, kind: input, shape index: {}]
  %s9 = inlined_call_operand.vmem [shape: f32[16,1], index: 9, kind: output, shape index: {}]
  %s10 = sld [smem:[#allocation0]]
  $region58: #{tpu_custom_call.1} parent=0
    _
  %s12 = ssub.s32 1, %s10
  %s13 = scalar_select 0, %s12, %s10
  %v14 = vstv %s8
  %15 = vst [vmem:[#allocation2] sm:$0x1] %v14
  $region1: #{tpu_custom_call.1} parent=0
    #allocation3 [shape = 'u8[8192]{0}', space=vmem, size = 0x2000, scoped, tag = 'input window, operand 1, single buffered']
    #allocation4 [shape = 's32[1]{0}', space=sflag, size = 0x4, scoped, tag = 'scoped memory for tpu_custom_call.1']
    #allocation5 [shape = 'u8[512]{0}', space=vmem, size = 0x400, scoped, tag = 'input window, operand 2, single buffered']
    #allocation6 [shape = 's32[1]{0}', space=sflag, size = 0x4, scoped, tag = 'scoped memory for tpu_custom_call.1']
    #allocation7 [shape = 'u8[32768]{0}', space=vmem, size = 0x8000, scoped, tag = 'input window, operand 5, single buffered']
    %16 = vsyncpa [#allocation4], 0
    %17 = vsyncpa [#allocation6], 0
    // Predicated region
    $region2: #{tpu_custom_call.1} parent=1 // pred_check
      _
    $region3: #{tpu_custom_call.1} parent=1 // pred_check_branch
      %19 = sbr.rel (0) target = $region5
    $region4: #{tpu_custom_call.1} parent=1 // pred_region
      _
    $region5: #{tpu_custom_call.1} parent=1 // pred_fallthru
      _
    // Predicated region
    $region6: #{tpu_custom_call.1} parent=1 // pred_check
      _
    $region7: #{tpu_custom_call.1} parent=1 // pred_check_branch
      %21 = sbr.rel (0) target = $region9
    $region8: #{tpu_custom_call.1} parent=1 // pred_region
      %s23 = ssub.s32 256, 256
      %24 = vsyncadd [#allocation4], %s23
      %s25 = sshll.u32 [#allocation3], 4
      %s26 = int_to_ptr.vmem [resolvable:$true] %s25
      %31 = dma.hbm_to_vmem [thread:$0]  %s1, 256, %s26, [#allocation4], 64, 64, 4
    $region9: #{tpu_custom_call.1} parent=1 // pred_fallthru
      _
    // Predicated region
    $region10: #{tpu_custom_call.1} parent=1 // pred_check
      _
    $region11: #{tpu_custom_call.1} parent=1 // pred_check_branch
      %33 = sbr.rel (0) target = $region13
    $region12: #{tpu_custom_call.1} parent=1 // pred_region
      %s35 = ssub.s32 16, 16
      %36 = vsyncadd [#allocation6], %s35
      %s38 = sshll.u32 [#allocation5], 4
      %s39 = int_to_ptr.vmem [resolvable:$true] %s38
      %41 = dma.hbm_to_vmem [thread:$0]  %s2, 16, %s39, [#allocation6]
    $region13: #{tpu_custom_call.1} parent=1 // pred_fallthru
      _
    // Predicated region
    $region14: #{tpu_custom_call.1} parent=1 // pred_check
      _
    $region15: #{tpu_custom_call.1} parent=1 // pred_check_branch
      %43 = sbr.rel (0) target = $region17
    $region16: #{tpu_custom_call.1} parent=1 // pred_region
      _
    $region17: #{tpu_custom_call.1} parent=1 // pred_fallthru
      _
    // Predicated region
    $region18: #{tpu_custom_call.1} parent=1 // pred_check
      _
    $region19: #{tpu_custom_call.1} parent=1 // pred_check_branch
      %45 = sbr.rel (0) target = $region21
    $region20: #{tpu_custom_call.1} parent=1 // pred_region
      _
    $region21: #{tpu_custom_call.1} parent=1 // pred_fallthru
      _
    // Predicated region
    $region22: #{tpu_custom_call.1} parent=1 // pred_check
      _
    $region23: #{tpu_custom_call.1} parent=1 // pred_check_branch
      %47 = sbr.rel (0) target = $region25
    $region24: #{tpu_custom_call.1} parent=1 // pred_region
      %s49 = ssub.s32 1024, 1024
      %50 = vsyncadd [#allocation6], %s49
      %s51 = sshll.u32 [#allocation7], 4
      %s52 = int_to_ptr.vmem [resolvable:$true] %s51
      %57 = dma.hbm_to_vmem [thread:$0]  %s5, 1024, %s52, [#allocation6], 64, 64, 4
    $region25: #{tpu_custom_call.1} parent=1 // pred_fallthru
      _
    // Predicated region
    $region26: #{tpu_custom_call.1} parent=1 // pred_check
      _
    $region27: #{tpu_custom_call.1} parent=1 // pred_check_branch
      %59 = sbr.rel (0) target = $region29
    $region28: #{tpu_custom_call.1} parent=1 // pred_region
      _
    $region29: #{tpu_custom_call.1} parent=1 // pred_fallthru
      _
    // Predicated region
    $region30: #{tpu_custom_call.1} parent=1 // pred_check
      _
    $region31: #{tpu_custom_call.1} parent=1 // pred_check_branch
      %61 = sbr.rel (0) target = $region33
    $region32: #{tpu_custom_call.1} parent=1 // pred_region
      _
    $region33: #{tpu_custom_call.1} parent=1 // pred_fallthru
      _
    // Predicated region
    $region34: #{tpu_custom_call.1} parent=1 // pred_check
      _
    $region35: #{tpu_custom_call.1} parent=1 // pred_check_branch
      %63 = sbr.rel (0) target = $region37
    $region36: #{tpu_custom_call.1} parent=1 // pred_region
      _
    $region37: #{tpu_custom_call.1} parent=1 // pred_fallthru
      _
    // Predicated region
    $region38: #{tpu_custom_call.1} parent=1 // pred_check
      _
    $region39: #{tpu_custom_call.1} parent=1 // pred_check_branch
      %65 = sbr.rel (0) target = $region41
    $region40: #{tpu_custom_call.1} parent=1 // pred_region
      %66 = dma.done [#allocation4], 256
    $region41: #{tpu_custom_call.1} parent=1 // pred_fallthru
      _
    // Predicated region
    $region42: #{tpu_custom_call.1} parent=1 // pred_check
      _
    $region43: #{tpu_custom_call.1} parent=1 // pred_check_branch
      %68 = sbr.rel (0) target = $region45
    $region44: #{tpu_custom_call.1} parent=1 // pred_region
      %69 = dma.done [#allocation6], 16
    $region45: #{tpu_custom_call.1} parent=1 // pred_fallthru
      _
    // Predicated region
    $region46: #{tpu_custom_call.1} parent=1 // pred_check
      _
    $region47: #{tpu_custom_call.1} parent=1 // pred_check_branch
      %71 = sbr.rel (0) target = $region49
    $region48: #{tpu_custom_call.1} parent=1 // pred_region
      %72 = dma.done [#allocation6], 1024
    $region49: #{tpu_custom_call.1} parent=1 // pred_fallthru
      _
    %v74 = vld [vmem:[%s0] sm:$0xff]
    %v75 = vld [vmem:[%s0 + $0x8] sm:$0xff]
    %v76 = vpack.c.bf16 %v75, %v74
    %v77 = vld [vmem:[#allocation3] sm:$0xf]
    %v78 = vld [vmem:[#allocation3 + $0x4] sm:$0xf]
    %v79 = vld [vmem:[#allocation3 + $0x8] sm:$0xf]
    %v80 = vld [vmem:[#allocation3 + $0xc] sm:$0xf]
    %v81 = vld [vmem:[#allocation5] sm:$0x1]
    %v83 = vlaneseq
    %v84 = vshrl.u32 %v83, 7
    %v85 = vsub.s32 0, %v84
    %v86 = vrot.slane %v81, %v85
    %v92 = vunpack.c.l.b16 %v77
    %v93 = vunpack.c.l.b16 %v78
    %v94 = vunpack.c.l.b16 %v79
    %v95 = vunpack.c.l.b16 %v80
    %v96 = vpack.c.b16 %v93, %v92
    %v97 = vpack.c.b16 %v95, %v94
    %vm100 = vcmask 261120
    %v102 = vsel %vm100, %v76, 0
    %104 = vmatprep.subr.bf16.mxu0 0
    %105 = vmatpush1.bf16.msra.mxu0 %v96
    %106 = vmatprep.subr.bf16.mxu0 0
    %107 = vmatpush1.bf16.msra.mxu0 %v97
    %108 = vmatprep.subr.bf16.mxu0 0
    %109 = vmatpush1.bf16.msra.mxu0 0
    %110 = vmatprep.subr.bf16.mxu0 0
    %111 = vmatpush1.bf16.msra.mxu0 0
    %112 = vmatprep.subr.bf16.mxu0 0
    %113 = vmatpush1.bf16.msra.mxu0 0
    %114 = vmatprep.subr.bf16.mxu0 0
    %115 = vmatpush1.bf16.msra.mxu0 0
    %116 = vmatprep.subr.bf16.mxu0 0
    %117 = vmatpush1.bf16.msra.mxu0 0
    %118 = vmatprep.subr.bf16.mxu0 0
    %119 = vmatpush1.bf16.msra.mxu0 0
    %120 = vmatprep.subr.bf16.mxu0 0
    %121 = vmatpush1.bf16.msra.mxu0 0
    %122 = vmatprep.subr.bf16.mxu0 0
    %123 = vmatpush1.bf16.msra.mxu0 0
    %124 = vmatprep.subr.bf16.mxu0 0
    %125 = vmatpush1.bf16.msra.mxu0 0
    %126 = vmatprep.subr.bf16.mxu0 0
    %127 = vmatpush1.bf16.msra.mxu0 0
    %128 = vmatprep.subr.bf16.mxu0 0
    %129 = vmatpush1.bf16.msra.mxu0 0
    %130 = vmatprep.subr.bf16.mxu0 0
    %131 = vmatpush1.bf16.msra.mxu0 0
    %132 = vmatprep.subr.bf16.mxu0 0
    %133 = vmatpush1.bf16.msra.mxu0 0
    %134 = vmatprep.subr.bf16.mxu0 0
    %135 = vmatpush1.bf16.msra.mxu0 0
    %136 = vmatprep.mubr.bf16.mxu0 0
    %137 = vmatmul.mubr.bf16.gmra.mrb[0].mxu0 %v102
    %v138 = vpop.f32.mrb[0].mxu0
    %v139 = vadd.f32 %v86, %v138
    %v140 = vpop.f32.mrb[0].mxu0
    %v141 = vpop.f32.mrb[0].mxu0
    %v142 = vadd.f32 %v86, %v141
    %v143 = vpop.f32.mrb[0].mxu0
    %144 = vdwg.mxu0
    %v145 = vmax.f32 %v139, 0.0
    %v146 = vmax.f32 %v142, 0.0
    %v147 = vpack.c.bf16 %v146, %v145
    %v148 = vld [vmem:[%s3] sm:$0xf]
    %v149 = vld [vmem:[%s3 + $0x4] sm:$0xf]
    %v150 = vld [vmem:[%s3 + $0x8] sm:$0xf]
    %v151 = vld [vmem:[%s3 + $0xc] sm:$0xf]
    %v152 = vld [vmem:[%s3 + $0x10] sm:$0xf]
    %v153 = vld [vmem:[%s3 + $0x14] sm:$0xf]
    %v154 = vld [vmem:[%s3 + $0x18] sm:$0xf]
    %v155 = vld [vmem:[%s3 + $0x1c] sm:$0xf]
    %v156 = vld [vmem:[%s3 + $0x20] sm:$0xf]
    %v157 = vld [vmem:[%s3 + $0x24] sm:$0xf]
    %v158 = vld [vmem:[%s3 + $0x28] sm:$0xf]
    %v159 = vld [vmem:[%s3 + $0x2c] sm:$0xf]
    %v160 = vld [vmem:[%s3 + $0x30] sm:$0xf]
    %v161 = vld [vmem:[%s3 + $0x34] sm:$0xf]
    %v162 = vld [vmem:[%s3 + $0x38] sm:$0xf]
    %v163 = vld [vmem:[%s3 + $0x3c] sm:$0xf]
    %v164 = vld [vmem:[%s4] sm:$0x1]
    %v166 = vlaneseq
    %v167 = vshrl.u32 %v166, 7
    %v168 = vsub.s32 0, %v167
    %v169 = vrot.slane %v164, %v168
    %v187 = vunpack.c.l.b16 %v148
    %v188 = vunpack.c.l.b16 %v149
    %v189 = vunpack.c.l.b16 %v150
    %v190 = vunpack.c.l.b16 %v151
    %v191 = vunpack.c.l.b16 %v152
    %v192 = vunpack.c.l.b16 %v153
    %v193 = vunpack.c.l.b16 %v154
    %v194 = vunpack.c.l.b16 %v155
    %v195 = vunpack.c.l.b16 %v156
    %v196 = vunpack.c.l.b16 %v157
    %v197 = vunpack.c.l.b16 %v158
    %v198 = vunpack.c.l.b16 %v159
    %v199 = vunpack.c.l.b16 %v160
    %v200 = vunpack.c.l.b16 %v161
    %v201 = vunpack.c.l.b16 %v162
    %v202 = vunpack.c.l.b16 %v163
    %v203 = vpack.c.b16 %v188, %v187
    %v204 = vpack.c.b16 %v190, %v189
    %v205 = vpack.c.b16 %v192, %v191
    %v206 = vpack.c.b16 %v194, %v193
    %v207 = vpack.c.b16 %v196, %v195
    %v208 = vpack.c.b16 %v198, %v197
    %v209 = vpack.c.b16 %v200, %v199
    %v210 = vpack.c.b16 %v202, %v201
    %219 = vmatprep.subr.bf16.mxu0 0
    %220 = vmatpush1.bf16.msra.mxu0 %v203
    %221 = vmatprep.subr.bf16.mxu0 0
    %222 = vmatpush1.bf16.msra.mxu0 %v204
    %223 = vmatprep.subr.bf16.mxu0 0
    %224 = vmatpush1.bf16.msra.mxu0 %v205
    %225 = vmatprep.subr.bf16.mxu0 0
    %226 = vmatpush1.bf16.msra.mxu0 %v206
    %227 = vmatprep.subr.bf16.mxu0 0
    %228 = vmatpush1.bf16.msra.mxu0 %v207
    %229 = vmatprep.subr.bf16.mxu0 0
    %230 = vmatpush1.bf16.msra.mxu0 %v208
    %231 = vmatprep.subr.bf16.mxu0 0
    %232 = vmatpush1.bf16.msra.mxu0 %v209
    %233 = vmatprep.subr.bf16.mxu0 0
    %234 = vmatpush1.bf16.msra.mxu0 %v210
    %235 = vmatprep.subr.bf16.mxu0 0
    %236 = vmatpush1.bf16.msra.mxu0 0
    %237 = vmatprep.subr.bf16.mxu0 0
    %238 = vmatpush1.bf16.msra.mxu0 0
    %239 = vmatprep.subr.bf16.mxu0 0
    %240 = vmatpush1.bf16.msra.mxu0 0
    %241 = vmatprep.subr.bf16.mxu0 0
    %242 = vmatpush1.bf16.msra.mxu0 0
    %243 = vmatprep.subr.bf16.mxu0 0
    %244 = vmatpush1.bf16.msra.mxu0 0
    %245 = vmatprep.subr.bf16.mxu0 0
    %246 = vmatpush1.bf16.msra.mxu0 0
    %247 = vmatprep.subr.bf16.mxu0 0
    %248 = vmatpush1.bf16.msra.mxu0 0
    %249 = vmatprep.subr.bf16.mxu0 0
    %250 = vmatpush1.bf16.msra.mxu0 0
    %251 = vmatprep.mubr.bf16.mxu0 0
    %252 = vmatmul.mubr.bf16.gmra.mrb[0].mxu0 %v147
    %v253 = vpop.f32.mrb[0].mxu0
    %v254 = vadd.f32 %v169, %v253
    %v255 = vpop.f32.mrb[0].mxu0
    %v256 = vpop.f32.mrb[0].mxu0
    %v257 = vadd.f32 %v169, %v256
    %v258 = vpop.f32.mrb[0].mxu0
    %259 = vdwg.mxu0
    %v260 = vmax.f32 %v254, 0.0
    %v261 = vmax.f32 %v257, 0.0
    %v262 = vpack.c.bf16 %v261, %v260
    %v263 = vld [vmem:[#allocation7] sm:$0xf]
    %v264 = vld [vmem:[#allocation7 + $0x4] sm:$0xf]
    %v265 = vld [vmem:[#allocation7 + $0x8] sm:$0xf]
    %v266 = vld [vmem:[#allocation7 + $0xc] sm:$0xf]
    %v267 = vld [vmem:[#allocation7 + $0x10] sm:$0xf]
    %v268 = vld [vmem:[#allocation7 + $0x14] sm:$0xf]
    %v269 = vld [vmem:[#allocation7 + $0x18] sm:$0xf]
    %v270 = vld [vmem:[#allocation7 + $0x1c] sm:$0xf]
    %v271 = vld [vmem:[#allocation7 + $0x20] sm:$0xf]
    %v272 = vld [vmem:[#allocation7 + $0x24] sm:$0xf]
    %v273 = vld [vmem:[#allocation7 + $0x28] sm:$0xf]
    %v274 = vld [vmem:[#allocation7 + $0x2c] sm:$0xf]
    %v275 = vld [vmem:[#allocation7 + $0x30] sm:$0xf]
    %v276 = vld [vmem:[#allocation7 + $0x34] sm:$0xf]
    %v277 = vld [vmem:[#allocation7 + $0x38] sm:$0xf]
    %v278 = vld [vmem:[#allocation7 + $0x3c] sm:$0xf]
    %v279 = vld [vmem:[%s6] sm:$0x1]
    %v281 = vlaneseq
    %v282 = vshrl.u32 %v281, 7
    %v283 = vsub.s32 0, %v282
    %v284 = vrot.slane %v279, %v283
    %v302 = vunpack.c.l.b16 %v263
    %v303 = vunpack.c.l.b16 %v264
    %v304 = vunpack.c.l.b16 %v265
    %v305 = vunpack.c.l.b16 %v266
    %v306 = vunpack.c.l.b16 %v267
    %v307 = vunpack.c.l.b16 %v268
    %v308 = vunpack.c.l.b16 %v269
    %v309 = vunpack.c.l.b16 %v270
    %v310 = vunpack.c.l.b16 %v271
    %v311 = vunpack.c.l.b16 %v272
    %v312 = vunpack.c.l.b16 %v273
    %v313 = vunpack.c.l.b16 %v274
    %v314 = vunpack.c.l.b16 %v275
    %v315 = vunpack.c.l.b16 %v276
    %v316 = vunpack.c.l.b16 %v277
    %v317 = vunpack.c.l.b16 %v278
    %v318 = vpack.c.b16 %v303, %v302
    %v319 = vpack.c.b16 %v305, %v304
    %v320 = vpack.c.b16 %v307, %v306
    %v321 = vpack.c.b16 %v309, %v308
    %v322 = vpack.c.b16 %v311, %v310
    %v323 = vpack.c.b16 %v313, %v312
    %v324 = vpack.c.b16 %v315, %v314
    %v325 = vpack.c.b16 %v317, %v316
    %334 = vmatprep.subr.bf16.mxu0 0
    %335 = vmatpush1.bf16.msra.mxu0 %v318
    %336 = vmatprep.subr.bf16.mxu0 0
    %337 = vmatpush1.bf16.msra.mxu0 %v319
    %338 = vmatprep.subr.bf16.mxu0 0
    %339 = vmatpush1.bf16.msra.mxu0 %v320
    %340 = vmatprep.subr.bf16.mxu0 0
    %341 = vmatpush1.bf16.msra.mxu0 %v321
    %342 = vmatprep.subr.bf16.mxu0 0
    %343 = vmatpush1.bf16.msra.mxu0 %v322
    %344 = vmatprep.subr.bf16.mxu0 0
    %345 = vmatpush1.bf16.msra.mxu0 %v323
    %346 = vmatprep.subr.bf16.mxu0 0
    %347 = vmatpush1.bf16.msra.mxu0 %v324
    %348 = vmatprep.subr.bf16.mxu0 0
    %349 = vmatpush1.bf16.msra.mxu0 %v325
    %350 = vmatprep.subr.bf16.mxu0 0
    %351 = vmatpush1.bf16.msra.mxu0 0
    %352 = vmatprep.subr.bf16.mxu0 0
    %353 = vmatpush1.bf16.msra.mxu0 0
    %354 = vmatprep.subr.bf16.mxu0 0
    %355 = vmatpush1.bf16.msra.mxu0 0
    %356 = vmatprep.subr.bf16.mxu0 0
    %357 = vmatpush1.bf16.msra.mxu0 0
    %358 = vmatprep.subr.bf16.mxu0 0
    %359 = vmatpush1.bf16.msra.mxu0 0
    %360 = vmatprep.subr.bf16.mxu0 0
    %361 = vmatpush1.bf16.msra.mxu0 0
    %362 = vmatprep.subr.bf16.mxu0 0
    %363 = vmatpush1.bf16.msra.mxu0 0
    %364 = vmatprep.subr.bf16.mxu0 0
    %365 = vmatpush1.bf16.msra.mxu0 0
    %366 = vmatprep.mubr.bf16.mxu0 0
    %367 = vmatmul.mubr.bf16.gmra.mrb[0].mxu0 %v262
    %v368 = vpop.f32.mrb[0].mxu0
    %v369 = vadd.f32 %v284, %v368
    %v370 = vpop.f32.mrb[0].mxu0
    %v371 = vpop.f32.mrb[0].mxu0
    %v372 = vadd.f32 %v284, %v371
    %v373 = vpop.f32.mrb[0].mxu0
    %374 = vdwg.mxu0
    %v375 = vmax.f32 %v369, 0.0
    %v376 = vmax.f32 %v372, 0.0
    %v377 = vpack.c.bf16 %v376, %v375
    %v378 = vld [vmem:[%s7] sm:$0xf]
    %v379 = vld [vmem:[%s7 + $0x4] sm:$0xf]
    %v380 = vld [vmem:[%s7 + $0x8] sm:$0xf]
    %v381 = vld [vmem:[%s7 + $0xc] sm:$0xf]
    %v382 = vld [vmem:[%s7 + $0x10] sm:$0xf]
    %v383 = vld [vmem:[%s7 + $0x14] sm:$0xf]
    %v384 = vld [vmem:[%s7 + $0x18] sm:$0xf]
    %v385 = vld [vmem:[%s7 + $0x1c] sm:$0xf]
    %v386 = vld [vmem:[%s7 + $0x20] sm:$0xf]
    %v387 = vld [vmem:[%s7 + $0x24] sm:$0xf]
    %v388 = vld [vmem:[%s7 + $0x28] sm:$0xf]
    %v389 = vld [vmem:[%s7 + $0x2c] sm:$0xf]
    %v390 = vld [vmem:[%s7 + $0x30] sm:$0xf]
    %v391 = vld [vmem:[%s7 + $0x34] sm:$0xf]
    %v392 = vld [vmem:[%s7 + $0x38] sm:$0xf]
    %v393 = vld [vmem:[%s7 + $0x3c] sm:$0xf]
    %v394 = vld [vmem:[#allocation2] sm:$0x1]
    %v396 = vlaneseq
    %v397 = vshrl.u32 %v396, 7
    %v398 = vsub.s32 0, %v397
    %v399 = vrot.slane %v394, %v398
    %v417 = vunpack.c.l.b16 %v378
    %v418 = vunpack.c.l.b16 %v379
    %v419 = vunpack.c.l.b16 %v380
    %v420 = vunpack.c.l.b16 %v381
    %v421 = vunpack.c.l.b16 %v382
    %v422 = vunpack.c.l.b16 %v383
    %v423 = vunpack.c.l.b16 %v384
    %v424 = vunpack.c.l.b16 %v385
    %v425 = vunpack.c.l.b16 %v386
    %v426 = vunpack.c.l.b16 %v387
    %v427 = vunpack.c.l.b16 %v388
    %v428 = vunpack.c.l.b16 %v389
    %v429 = vunpack.c.l.b16 %v390
    %v430 = vunpack.c.l.b16 %v391
    %v431 = vunpack.c.l.b16 %v392
    %v432 = vunpack.c.l.b16 %v393
    %v433 = vpack.c.b16 %v418, %v417
    %v434 = vpack.c.b16 %v420, %v419
    %v435 = vpack.c.b16 %v422, %v421
    %v436 = vpack.c.b16 %v424, %v423
    %v437 = vpack.c.b16 %v426, %v425
    %v438 = vpack.c.b16 %v428, %v427
    %v439 = vpack.c.b16 %v430, %v429
    %v440 = vpack.c.b16 %v432, %v431
    %449 = vmatprep.subr.bf16.mxu0 0
    %450 = vmatpush1.bf16.msra.mxu0 %v433
    %451 = vmatprep.subr.bf16.mxu0 0
    %452 = vmatpush1.bf16.msra.mxu0 %v434
    %453 = vmatprep.subr.bf16.mxu0 0
    %454 = vmatpush1.bf16.msra.mxu0 %v435
    %455 = vmatprep.subr.bf16.mxu0 0
    %456 = vmatpush1.bf16.msra.mxu0 %v436
    %457 = vmatprep.subr.bf16.mxu0 0
    %458 = vmatpush1.bf16.msra.mxu0 %v437
    %459 = vmatprep.subr.bf16.mxu0 0
    %460 = vmatpush1.bf16.msra.mxu0 %v438
    %461 = vmatprep.subr.bf16.mxu0 0
    %462 = vmatpush1.bf16.msra.mxu0 %v439
    %463 = vmatprep.subr.bf16.mxu0 0
    %464 = vmatpush1.bf16.msra.mxu0 %v440
    %465 = vmatprep.subr.bf16.mxu0 0
    %466 = vmatpush1.bf16.msra.mxu0 0
    %467 = vmatprep.subr.bf16.mxu0 0
    %468 = vmatpush1.bf16.msra.mxu0 0
    %469 = vmatprep.subr.bf16.mxu0 0
    %470 = vmatpush1.bf16.msra.mxu0 0
    %471 = vmatprep.subr.bf16.mxu0 0
    %472 = vmatpush1.bf16.msra.mxu0 0
    %473 = vmatprep.subr.bf16.mxu0 0
    %474 = vmatpush1.bf16.msra.mxu0 0
    %475 = vmatprep.subr.bf16.mxu0 0
    %476 = vmatpush1.bf16.msra.mxu0 0
    %477 = vmatprep.subr.bf16.mxu0 0
    %478 = vmatpush1.bf16.msra.mxu0 0
    %479 = vmatprep.subr.bf16.mxu0 0
    %480 = vmatpush1.bf16.msra.mxu0 0
    %481 = vmatprep.mubr.bf16.mxu0 0
    %482 = vmatmul.mubr.bf16.gmra.mrb[0].mxu0 %v377
    %v483 = vpop.f32.mrb[0].mxu0
    %v484 = vadd.f32 %v399, %v483
    %v485 = vpop.f32.mrb[0].mxu0
    %v486 = vpop.f32.mrb[0].mxu0
    %v487 = vadd.f32 %v399, %v486
    %v488 = vpop.f32.mrb[0].mxu0
    %489 = vdwg.mxu0
    %vm490 = vcmask 7168
    %491 = vst.msk [vmem:[%s9] sm:$0xff] %vm490, %v484
    %492 = vst.msk [vmem:[%s9 + $0x8] sm:$0xff] %vm490, %v487
    // Predicated region
    $region50: #{tpu_custom_call.1} parent=1 // pred_check
      _
    $region51: #{tpu_custom_call.1} parent=1 // pred_check_branch
      %494 = sbr.rel (0) target = $region53
    $region52: #{tpu_custom_call.1} parent=1 // pred_region
      _
    $region53: #{tpu_custom_call.1} parent=1 // pred_fallthru
      _
    // Predicated region
    $region54: #{tpu_custom_call.1} parent=1 // pred_check
      _
    $region55: #{tpu_custom_call.1} parent=1 // pred_check_branch
      %496 = sbr.rel (0) target = $region57
    $region56: #{tpu_custom_call.1} parent=1 // pred_region
      _
    $region57: #{tpu_custom_call.1} parent=1 // pred_fallthru
      _
    %497 = vsyncpa [#allocation4], 1
    %498 = vsyncpa [#allocation6], 1

</llo_original>
